<compile_context>
chip_gen: v7x
topology: tpu7x:2x2x1
jax: 0.10.0
libtpu: 0.0.40
codegen_flags: <defaults>
</compile_context>

<pallas_src>
import functools

import jax
import jax.numpy as jnp
from jax.experimental import pallas as pl
from jax.experimental.pallas import tpu as pltpu


def _round_up(x, m):
    return ((x + m - 1) // m) * m


def _asp_kernel(x_ref, w1_ref, b1_ref, v_ref, o_ref,
                m_ref, l_ref, mu_ref, sq_ref,
                *, t_true, t_tile, eps):
    t = pl.program_id(1)
    nt = pl.num_programs(1)

    @pl.when(t == 0)
    def _init():
        m_ref[...] = jnp.full(m_ref.shape, -jnp.inf, jnp.float32)
        l_ref[...] = jnp.zeros(l_ref.shape, jnp.float32)
        mu_ref[...] = jnp.zeros(mu_ref.shape, jnp.float32)
        sq_ref[...] = jnp.zeros(sq_ref.shape, jnp.float32)

    x = x_ref[0].astype(jnp.float32)          # (t_tile, C)  C on lanes
    w1 = w1_ref[...].astype(jnp.float32)      # (C, A)
    b1 = b1_ref[...].astype(jnp.float32)      # (1, A)
    v = v_ref[...].astype(jnp.float32)        # (1, A)

    # Frame-wise attention scores: MXU matmul (t_tile, C) @ (C, A), then
    # tanh on the EUP, then a lane reduce against v -> (t_tile, 1).
    h = jnp.tanh(jnp.dot(x, w1, preferred_element_type=jnp.float32) + b1)
    e = jnp.sum(h * v, axis=-1, keepdims=True)                 # (t_tile, 1)

    # Mask padded frames (only emitted when T does not divide the tile).
    if t_true % t_tile != 0:
        frame = t * t_tile + jax.lax.broadcasted_iota(
            jnp.int32, (t_tile, 1), 0)
        e = jnp.where(frame < t_true, e, -jnp.inf)

    # Online softmax update.
    m_prev = m_ref[...]                                         # (1, 1)
    m_new = jnp.maximum(m_prev, jnp.max(e, axis=0, keepdims=True))
    corr = jnp.exp(m_prev - m_new)                              # (1, 1)
    p = jnp.exp(e - m_new)                                      # (t_tile, 1)

    px = p * x                                                  # (t_tile, C)
    l_ref[...] = corr * l_ref[...] + jnp.sum(p, axis=0, keepdims=True)
    mu_ref[...] = corr * mu_ref[...] + jnp.sum(px, axis=0, keepdims=True)
    sq_ref[...] = corr * sq_ref[...] + jnp.sum(px * x, axis=0, keepdims=True)
    m_ref[...] = m_new

    @pl.when(t == nt - 1)
    def _finalize():
        inv_l = 1.0 / l_ref[...]                                # (1, 1)
        mean = mu_ref[...] * inv_l                              # (1, C)
        ex2 = sq_ref[...] * inv_l                               # (1, C)
        std = jnp.sqrt(jnp.maximum(ex2 - mean * mean, eps))     # (1, C)
        o_ref[0] = jnp.concatenate([mean, std], axis=0).astype(o_ref.dtype)


def attentive_statistics_pooling(x, w1, b1, v, *, t_tile=256, eps=1e-5,
                                 interpret=False):
    """ASP forward.

    x : (B, C, T)   input features (PyTorch layout)
    w1: (C, A)      attention projection weight (Linear(dim, dim) in the ref)
    b1: (A,)        attention projection bias
    v : (A,)        attention context vector
    returns (B, 2*C) = concat([weighted mean, weighted std], axis=1)
    """
    B, C, T = x.shape
    A = w1.shape[1]
    assert w1.shape == (C, A) and b1.shape == (A,) and v.shape == (A,)

    # Layout change in the wrapper (outside the kernel): frames on the
    # sublane/grid axis, channels on the lane axis.
    xt = jnp.transpose(x, (0, 2, 1))                            # (B, T, C)

    # Tile the frame axis; keep it (8,)-aligned. For realistic shapes
    # (C ~ 1536, f32) a 256-frame tile keeps 2x double-buffered input blocks
    # + the resident W1 comfortably under v7x's 64 MiB VMEM.
    t_tile = _round_up(max(8, min(t_tile, _round_up(T, 8))), 8)
    t_pad = _round_up(T, t_tile)
    if t_pad != T:
        xt = jnp.pad(xt, ((0, 0), (0, t_pad - T), (0, 0)))
    nt = t_pad // t_tile

    b1_2d = jnp.reshape(b1, (1, A))
    v_2d = jnp.reshape(v, (1, A))

    kernel = functools.partial(_asp_kernel, t_true=T, t_tile=t_tile, eps=eps)

    out = pl.pallas_call(
        kernel,
        out_shape=jax.ShapeDtypeStruct((B, 2, C), x.dtype),
        grid_spec=pltpu.PrefetchScalarGridSpec(
            num_scalar_prefetch=0,
            grid=(B, nt),
            in_specs=[
                pl.BlockSpec((1, t_tile, C), lambda b, t: (b, t, 0)),  # x
                pl.BlockSpec((C, A), lambda b, t: (0, 0)),             # W1
                pl.BlockSpec((1, A), lambda b, t: (0, 0)),             # b1
                pl.BlockSpec((1, A), lambda b, t: (0, 0)),             # v
            ],
            out_specs=pl.BlockSpec((1, 2, C), lambda b, t: (b, 0, 0)),
            scratch_shapes=[
                pltpu.VMEM((1, 1), jnp.float32),   # running max
                pltpu.VMEM((1, 1), jnp.float32),   # running softmax denom
                pltpu.VMEM((1, C), jnp.float32),   # weighted sum of x
                pltpu.VMEM((1, C), jnp.float32),   # weighted sum of x^2
            ],
        ),
        compiler_params=pltpu.CompilerParams(
            dimension_semantics=("parallel", "arbitrary")),
        interpret=interpret,
    )(xt, w1, b1_2d, v_2d)

    # (B, 2, C) -> (B, 2C) == concat([mean, std], axis=1)
    return jnp.reshape(out, (B, 2 * C))


def _asp_ref(x, w1, b1, v, eps=1e-5):
    """Pure-JAX reference of the same ASP formula."""
    xt = jnp.transpose(x, (0, 2, 1)).astype(jnp.float32)        # (B, T, C)
    h = jnp.tanh(jnp.einsum('btc,ca->bta', xt, w1) + b1)
    e = jnp.einsum('bta,a->bt', h, v)
    w = jax.nn.softmax(e, axis=1)[..., None]                    # (B, T, 1)
    mu = jnp.sum(xt * w, axis=1)
    ex2 = jnp.sum(xt * xt * w, axis=1)
    std = jnp.sqrt(jnp.maximum(ex2 - mu * mu, eps))
    return jnp.concatenate([mu, std], axis=1).astype(x.dtype)


if __name__ == "__main__":
    key = jax.random.PRNGKey(0)
    kx, kw, kb, kv = jax.random.split(key, 4)

    B, C, T = 2, 16, 40      # (#batch, channels/dim, frames)
    A = C                    # attention bottleneck = dim (nn.Linear(dim, dim))

    x = jax.random.normal(kx, (B, C, T), dtype=jnp.float32)
    w1 = jax.random.normal(kw, (C, A), dtype=jnp.float32) / jnp.sqrt(C)
    b1 = 0.1 * jax.random.normal(kb, (A,), dtype=jnp.float32)
    v = jax.random.normal(kv, (A,), dtype=jnp.float32)

    ref = _asp_ref(x, w1, b1, v)

    # Small T tile: exercises the multi-tile online-softmax accumulator and
    # the padded-remainder masking (40 frames = 2 full tiles + 8 valid + 8 pad).
    out = attentive_statistics_pooling(x, w1, b1, v, t_tile=16)
    out = jax.block_until_ready(out)
    assert out.shape == (B, 2 * C), out.shape
    assert jnp.allclose(out, ref, atol=1e-3, rtol=1e-3), \
        float(jnp.max(jnp.abs(out - ref)))

    # Default (single-tile) config as well.
    out2 = jax.block_until_ready(attentive_statistics_pooling(x, w1, b1, v))
    assert jnp.allclose(out2, ref, atol=1e-3, rtol=1e-3)

    print("KERNEL_OK")
</pallas_src>

<mosaic_0001>
module attributes {stable_mosaic.version = 11 : i64} {
  func.func @_asp_kernel(%arg0: i32, %arg1: i32, %arg2: memref<1x16x16xf32, #tpu.memory_space<vmem>>, %arg3: memref<16x16xf32, #tpu.memory_space<vmem>>, %arg4: memref<1x16xf32, #tpu.memory_space<vmem>>, %arg5: memref<1x16xf32, #tpu.memory_space<vmem>>, %arg6: memref<1x2x16xf32, #tpu.memory_space<vmem>>, %arg7: memref<1x1xf32, #tpu.memory_space<vmem>>, %arg8: memref<1x1xf32, #tpu.memory_space<vmem>>, %arg9: memref<1x16xf32, #tpu.memory_space<vmem>>, %arg10: memref<1x16xf32, #tpu.memory_space<vmem>>) attributes {dimension_semantics = [#tpu.dimension_semantics<parallel>, #tpu.dimension_semantics<arbitrary>], iteration_bounds = array<i64: 2, 3>, scalar_prefetch = 0 : i64, scratch_operands = 4 : i64, tpu.core_type = #tpu.core_type<tc>, window_params = [{transform_indices = @transform_0, window_bounds = array<i64: 1, 16, 16>}, {pipeline_mode = #tpu.pipeline_mode<synchronous>, transform_indices = @transform_1, window_bounds = array<i64: 16, 16>}, {pipeline_mode = #tpu.pipeline_mode<synchronous>, transform_indices = @transform_2, window_bounds = array<i64: 1, 16>}, {pipeline_mode = #tpu.pipeline_mode<synchronous>, transform_indices = @transform_3, window_bounds = array<i64: 1, 16>}, {transform_indices = @transform_4, window_bounds = array<i64: 1, 2, 16>}]} {
    %c0_i32 = arith.constant 0 : i32
    %0 = arith.cmpi eq, %arg1, %c0_i32 : i32
    %1 = arith.extui %0 : i1 to i32
    %c0_i32_0 = arith.constant 0 : i32
    %2 = arith.cmpi ne, %1, %c0_i32_0 : i32
    scf.if %2 {
      %cst_32 = arith.constant 0xFF800000 : f32
      %60 = vector.broadcast %cst_32 : f32 to vector<1x1xf32>
      %c0_33 = arith.constant 0 : index
      %c0_34 = arith.constant 0 : index
      %61 = vector.load %arg7[%c0_33, %c0_34] : memref<1x1xf32, #tpu.memory_space<vmem>>, vector<1x1xf32>
      tpu.vector_store %arg7[%c0_33, %c0_34], %60 {strides = array<i32>} : memref<1x1xf32, #tpu.memory_space<vmem>>, vector<1x1xf32>,
      %cst_35 = arith.constant 0.000000e+00 : f32
      %62 = vector.broadcast %cst_35 : f32 to vector<1x1xf32>
      %c0_36 = arith.constant 0 : index
      %c0_37 = arith.constant 0 : index
      %63 = vector.load %arg8[%c0_36, %c0_37] : memref<1x1xf32, #tpu.memory_space<vmem>>, vector<1x1xf32>
      tpu.vector_store %arg8[%c0_36, %c0_37], %62 {strides = array<i32>} : memref<1x1xf32, #tpu.memory_space<vmem>>, vector<1x1xf32>,
      %cst_38 = arith.constant 0.000000e+00 : f32
      %64 = vector.broadcast %cst_38 : f32 to vector<1x16xf32>
      %c0_39 = arith.constant 0 : index
      %c0_40 = arith.constant 0 : index
      %65 = vector.load %arg9[%c0_39, %c0_40] : memref<1x16xf32, #tpu.memory_space<vmem>>, vector<1x16xf32>
      tpu.vector_store %arg9[%c0_39, %c0_40], %64 {strides = array<i32>} : memref<1x16xf32, #tpu.memory_space<vmem>>, vector<1x16xf32>,
      %cst_41 = arith.constant 0.000000e+00 : f32
      %66 = vector.broadcast %cst_41 : f32 to vector<1x16xf32>
      %c0_42 = arith.constant 0 : index
      %c0_43 = arith.constant 0 : index
      %67 = vector.load %arg10[%c0_42, %c0_43] : memref<1x16xf32, #tpu.memory_space<vmem>>, vector<1x16xf32>
      tpu.vector_store %arg10[%c0_42, %c0_43], %66 {strides = array<i32>} : memref<1x16xf32, #tpu.memory_space<vmem>>, vector<1x16xf32>,
    } else {
    }
    %c0 = arith.constant 0 : index
    %c0_1 = arith.constant 0 : index
    %c0_2 = arith.constant 0 : index
    %3 = vector.load %arg2[%c0, %c0_1, %c0_2] : memref<1x16x16xf32, #tpu.memory_space<vmem>>, vector<1x16x16xf32>
    %4 = vector.shape_cast %3 : vector<1x16x16xf32> to vector<16x16xf32>
    %c0_3 = arith.constant 0 : index
    %c0_4 = arith.constant 0 : index
    %5 = vector.load %arg3[%c0_3, %c0_4] : memref<16x16xf32, #tpu.memory_space<vmem>>, vector<16x16xf32>
    %c0_5 = arith.constant 0 : index
    %c0_6 = arith.constant 0 : index
    %6 = vector.load %arg4[%c0_5, %c0_6] : memref<1x16xf32, #tpu.memory_space<vmem>>, vector<1x16xf32>
    %c0_7 = arith.constant 0 : index
    %c0_8 = arith.constant 0 : index
    %7 = vector.load %arg5[%c0_7, %c0_8] : memref<1x16xf32, #tpu.memory_space<vmem>>, vector<1x16xf32>
    %cst = arith.constant dense<0.000000e+00> : vector<16x16xf32>
    %8 = tpu.matmul %4, %5, %cst {dimension_numbers = #tpu.dot_dimension_numbers<[1], [0], [0], [1], [0, 0, 1, 1], [], []>} : vector<16x16xf32>, vector<16x16xf32>, vector<16x16xf32> -> vector<16x16xf32>
    %9 = vector.broadcast %6 : vector<1x16xf32> to vector<16x16xf32>
    %10 = arith.addf %8, %9 : vector<16x16xf32>
    %11 = math.tanh %10 : vector<16x16xf32>
    %12 = vector.broadcast %7 : vector<1x16xf32> to vector<16x16xf32>
    %13 = arith.mulf %11, %12 : vector<16x16xf32>
    %cst_9 = arith.constant dense<0.000000e+00> : vector<16xf32>
    %14 = vector.multi_reduction <add>, %13, %cst_9 [1] : vector<16x16xf32> to vector<16xf32>
    %15 = vector.shape_cast %14 : vector<16xf32> to vector<16x1xf32>
    %c16_i32 = arith.constant 16 : i32
    %16 = arith.muli %arg1, %c16_i32 : i32
    %17 = tpu.iota {dimensions = array<i32: 0>} : vector<16x1xi32>
    %18 = vector.broadcast %16 : i32 to vector<16x1xi32>
    %19 = arith.addi %18, %17 : vector<16x1xi32>
    %c40_i32 = arith.constant 40 : i32
    %20 = vector.broadcast %c40_i32 : i32 to vector<16x1xi32>
    %21 = arith.cmpi slt, %19, %20 : vector<16x1xi32>
    %cst_10 = arith.constant 0xFF800000 : f32
    %22 = vector.broadcast %cst_10 : f32 to vector<16x1xf32>
    %23 = arith.select %21, %15, %22 : vector<16x1xi1>, vector<16x1xf32>
    %c0_11 = arith.constant 0 : index
    %c0_12 = arith.constant 0 : index
    %24 = vector.load %arg7[%c0_11, %c0_12] : memref<1x1xf32, #tpu.memory_space<vmem>>, vector<1x1xf32>
    %cst_13 = arith.constant dense<0xFF800000> : vector<1xf32>
    %25 = vector.multi_reduction <maximumf>, %23, %cst_13 [0] : vector<16x1xf32> to vector<1xf32>
    %26 = vector.shape_cast %25 : vector<1xf32> to vector<1x1xf32>
    %27 = arith.maximumf %24, %26 : vector<1x1xf32>
    %28 = arith.subf %24, %27 : vector<1x1xf32>
    %29 = math.exp %28 : vector<1x1xf32>
    %30 = vector.broadcast %27 : vector<1x1xf32> to vector<16x1xf32>
    %31 = arith.subf %23, %30 : vector<16x1xf32>
    %32 = math.exp %31 : vector<16x1xf32>
    %33 = vector.broadcast %32 : vector<16x1xf32> to vector<16x16xf32>
    %34 = arith.mulf %33, %4 : vector<16x16xf32>
    %c0_14 = arith.constant 0 : index
    %c0_15 = arith.constant 0 : index
    %35 = vector.load %arg8[%c0_14, %c0_15] : memref<1x1xf32, #tpu.memory_space<vmem>>, vector<1x1xf32>
    %36 = arith.mulf %29, %35 : vector<1x1xf32>
    %cst_16 = arith.constant dense<0.000000e+00> : vector<1xf32>
    %37 = vector.multi_reduction <add>, %32, %cst_16 [0] : vector<16x1xf32> to vector<1xf32>
    %38 = vector.shape_cast %37 : vector<1xf32> to vector<1x1xf32>
    %39 = arith.addf %36, %38 : vector<1x1xf32>
    %c0_17 = arith.constant 0 : index
    %c0_18 = arith.constant 0 : index
    %40 = vector.load %arg8[%c0_17, %c0_18] : memref<1x1xf32, #tpu.memory_space<vmem>>, vector<1x1xf32>
    tpu.vector_store %arg8[%c0_17, %c0_18], %39 {strides = array<i32>} : memref<1x1xf32, #tpu.memory_space<vmem>>, vector<1x1xf32>,
    %c0_19 = arith.constant 0 : index
    %c0_20 = arith.constant 0 : index
    %41 = vector.load %arg9[%c0_19, %c0_20] : memref<1x16xf32, #tpu.memory_space<vmem>>, vector<1x16xf32>
    %42 = vector.broadcast %29 : vector<1x1xf32> to vector<1x16xf32>
    %43 = arith.mulf %42, %41 : vector<1x16xf32>
    %cst_21 = arith.constant dense<0.000000e+00> : vector<16xf32>
    %44 = vector.multi_reduction <add>, %34, %cst_21 [0] : vector<16x16xf32> to vector<16xf32>
    %45 = vector.shape_cast %44 : vector<16xf32> to vector<1x16xf32>
    %46 = arith.addf %43, %45 : vector<1x16xf32>
    %c0_22 = arith.constant 0 : index
    %c0_23 = arith.constant 0 : index
    %47 = vector.load %arg9[%c0_22, %c0_23] : memref<1x16xf32, #tpu.memory_space<vmem>>, vector<1x16xf32>
    tpu.vector_store %arg9[%c0_22, %c0_23], %46 {strides = array<i32>} : memref<1x16xf32, #tpu.memory_space<vmem>>, vector<1x16xf32>,
    %c0_24 = arith.constant 0 : index
    %c0_25 = arith.constant 0 : index
    %48 = vector.load %arg10[%c0_24, %c0_25] : memref<1x16xf32, #tpu.memory_space<vmem>>, vector<1x16xf32>
    %49 = vector.broadcast %29 : vector<1x1xf32> to vector<1x16xf32>
    %50 = arith.mulf %49, %48 : vector<1x16xf32>
    %51 = arith.mulf %34, %4 : vector<16x16xf32>
    %cst_26 = arith.constant dense<0.000000e+00> : vector<16xf32>
    %52 = vector.multi_reduction <add>, %51, %cst_26 [0] : vector<16x16xf32> to vector<16xf32>
    %53 = vector.shape_cast %52 : vector<16xf32> to vector<1x16xf32>
    %54 = arith.addf %50, %53 : vector<1x16xf32>
    %c0_27 = arith.constant 0 : index
    %c0_28 = arith.constant 0 : index
    %55 = vector.load %arg10[%c0_27, %c0_28] : memref<1x16xf32, #tpu.memory_space<vmem>>, vector<1x16xf32>
    tpu.vector_store %arg10[%c0_27, %c0_28], %54 {strides = array<i32>} : memref<1x16xf32, #tpu.memory_space<vmem>>, vector<1x16xf32>,
    %c0_29 = arith.constant 0 : index
    %c0_30 = arith.constant 0 : index
    %56 = vector.load %arg7[%c0_29, %c0_30] : memref<1x1xf32, #tpu.memory_space<vmem>>, vector<1x1xf32>
    tpu.vector_store %arg7[%c0_29, %c0_30], %27 {strides = array<i32>} : memref<1x1xf32, #tpu.memory_space<vmem>>, vector<1x1xf32>,
    %c2_i32 = arith.constant 2 : i32
    %57 = arith.cmpi eq, %arg1, %c2_i32 : i32
    %58 = arith.extui %57 : i1 to i32
    %c0_i32_31 = arith.constant 0 : i32
    %59 = arith.cmpi ne, %58, %c0_i32_31 : i32
    scf.if %59 {
      %c0_32 = arith.constant 0 : index
      %c0_33 = arith.constant 0 : index
      %60 = vector.load %arg8[%c0_32, %c0_33] : memref<1x1xf32, #tpu.memory_space<vmem>>, vector<1x1xf32>
      %cst_34 = arith.constant 1.000000e+00 : f32
      %61 = vector.broadcast %cst_34 : f32 to vector<1x1xf32>
      %62 = arith.divf %61, %60 : vector<1x1xf32>
      %c0_35 = arith.constant 0 : index
      %c0_36 = arith.constant 0 : index
      %63 = vector.load %arg9[%c0_35, %c0_36] : memref<1x16xf32, #tpu.memory_space<vmem>>, vector<1x16xf32>
      %64 = vector.broadcast %62 : vector<1x1xf32> to vector<1x16xf32>
      %65 = arith.mulf %63, %64 : vector<1x16xf32>
      %c0_37 = arith.constant 0 : index
      %c0_38 = arith.constant 0 : index
      %66 = vector.load %arg10[%c0_37, %c0_38] : memref<1x16xf32, #tpu.memory_space<vmem>>, vector<1x16xf32>
      %67 = vector.broadcast %62 : vector<1x1xf32> to vector<1x16xf32>
      %68 = arith.mulf %66, %67 : vector<1x16xf32>
      %69 = arith.mulf %65, %65 : vector<1x16xf32>
      %70 = arith.subf %68, %69 : vector<1x16xf32>
      %cst_39 = arith.constant 9.99999974E-6 : f32
      %71 = vector.broadcast %cst_39 : f32 to vector<1x16xf32>
      %72 = arith.maximumf %70, %71 : vector<1x16xf32>
      %73 = math.sqrt %72 : vector<1x16xf32>
      %74 = tpu.concatenate %65, %73 in 0 : vector<1x16xf32>, vector<1x16xf32> -> vector<2x16xf32>
      %c0_40 = arith.constant 0 : index
      %c0_41 = arith.constant 0 : index
      %c0_42 = arith.constant 0 : index
      %75 = vector.load %arg6[%c0_40, %c0_41, %c0_42] : memref<1x2x16xf32, #tpu.memory_space<vmem>>, vector<1x2x16xf32>
      %76 = vector.shape_cast %75 : vector<1x2x16xf32> to vector<2x16xf32>
      %77 = vector.shape_cast %74 : vector<2x16xf32> to vector<1x2x16xf32>
      tpu.vector_store %arg6[%c0_40, %c0_41, %c0_42], %77 {strides = array<i32>} : memref<1x2x16xf32, #tpu.memory_space<vmem>>, vector<1x2x16xf32>,
    } else {
    }
    return
  }
  func.func @transform_0(%arg0: i32, %arg1: i32) -> (i32, i32, i32) {
    %c0_i32 = arith.constant 0 : i32
    %c0_i32_0 = arith.constant 0 : i32
    return %arg0, %arg1, %c0_i32 : i32, i32, i32
  }
  func.func @transform_1(%arg0: i32, %arg1: i32) -> (i32, i32) {
    %c0_i32 = arith.constant 0 : i32
    %c0_i32_0 = arith.constant 0 : i32
    %c0_i32_1 = arith.constant 0 : i32
    return %c0_i32, %c0_i32_0 : i32, i32
  }
  func.func @transform_2(%arg0: i32, %arg1: i32) -> (i32, i32) {
    %c0_i32 = arith.constant 0 : i32
    %c0_i32_0 = arith.constant 0 : i32
    %c0_i32_1 = arith.constant 0 : i32
    return %c0_i32, %c0_i32_0 : i32, i32
  }
  func.func @transform_3(%arg0: i32, %arg1: i32) -> (i32, i32) {
    %c0_i32 = arith.constant 0 : i32
    %c0_i32_0 = arith.constant 0 : i32
    %c0_i32_1 = arith.constant 0 : i32
    return %c0_i32, %c0_i32_0 : i32, i32
  }
  func.func @transform_4(%arg0: i32, %arg1: i32) -> (i32, i32, i32) {
    %c0_i32 = arith.constant 0 : i32
    %c0_i32_0 = arith.constant 0 : i32
    %c0_i32_1 = arith.constant 0 : i32
    return %arg0, %c0_i32, %c0_i32_0 : i32, i32, i32
  }
}

</mosaic_0001>

<llo_original>
// kernel: tpu_custom_call.1
$region0: #{tpu_custom_call.1}
  #allocation0 [shape = 'u32[]', space=smem, size = 0x4, offset = 0x4, fixed_abs, tag = 'smem constant byte address 0x4 - core index']
  #allocation1 [shape = 'u32[144,128]{1,0:T(1,128)}', space=vmem, size = 0x12000, scoped, tag = 'internal scratch']
  #allocation2 [shape = 'f32[1,1]{1,0:T(1,128)}', space=vmem, size = 0x200, scoped, tag = 'scratch operand']
  #allocation3 [shape = 'f32[1,1]{1,0:T(1,128)}', space=vmem, size = 0x200, scoped, tag = 'scratch operand']
  #allocation4 [shape = 'f32[1,16]{1,0:T(1,128)}', space=vmem, size = 0x200, scoped, tag = 'scratch operand']
  #allocation5 [shape = 'f32[1,16]{1,0:T(1,128)}', space=vmem, size = 0x200, scoped, tag = 'scratch operand']
  %s0 = inlined_call_operand.vmem [shape: f32[2,48,16], index: 0, kind: input, shape index: {}]
  %s1 = inlined_call_operand.vmem [shape: f32[16,16], index: 1, kind: input, shape index: {}]
  %s2 = inlined_call_operand.vmem [shape: f32[1,16], index: 2, kind: input, shape index: {}]
  %s3 = inlined_call_operand.vmem [shape: f32[1,16], index: 3, kind: input, shape index: {}]
  %s4 = inlined_call_operand.hbm [shape: f32[2,2,16], index: 4, kind: output, shape index: {}]
  %s5 = sld [smem:[#allocation0]]
  $region57: #{tpu_custom_call.1} parent=0
    _
  %s7 = ssub.s32 1, %s5
  %s8 = scalar_select 0, %s7, %s5
  $region1: #{tpu_custom_call.1} parent=0
    #allocation6 [shape = 'u8[2048]{0}', space=vmem, size = 0x800, scoped, tag = 'output window, operand 0']
    #allocation7 [shape = 's32[2]{0}', space=sflag, size = 0x8, scoped, tag = 'scoped memory for tpu_custom_call.1']
    %9 = vsyncpa [#allocation7], 0
    %s10 = scalar_lea.sflag [#allocation7], 1
    %11 = vsyncpa %s10, 0
    loop: start=0, step=1, limit=8
    $region2: #{tpu_custom_call.1} parent=1 // loop_pre_header
      _
    $region3: #{tpu_custom_call.1} parent=1 // loop_header
      %s13 = sphi 0, %s17
      %p14 = scmp.ge.s32.totalorder %s13, 8
      %s20 = sphi 0, %s32
      %s21 = sphi 0, %s28
      %s22 = sphi 0, %s20
      %s23 = sphi 0, %s21
      %s24 = sphi 0, %s22
      %s25 = sphi 0, %s23
      %s37 = sphi 0, %s39
      %s40 = sphi 0, %s37
      %s41 = sphi 0, %s40
      %s57 = sphi 0, %s41
      %s61 = sphi 0, %s61
      %s63 = sphi 0, %s61
      %s64 = sphi 0, %s63
      %s78 = sphi 0, %s64
      %s82 = sphi 0, %s82
      %s84 = sphi 0, %s82
      %s85 = sphi 0, %s84
      %s99 = sphi 0, %s85
      %s103 = sphi 0, %s103
      %s105 = sphi 0, %s103
      %s106 = sphi 0, %s105
      %s120 = sphi 0, %s106
      %s126 = sphi 0, %s128
      %s129 = sphi 0, %s126
      %s130 = sphi 0, %s129
      %s146 = sphi 0, %s130
    $region4: #{tpu_custom_call.1} parent=1 // loop_header_branch
      %16 = sbr.rel (%p14) target = $region8
    $region5: #{tpu_custom_call.1} parent=1 // loop_body
      %s18 = ssub.s32 %s13, 1
      %s19 = ssub.s32 %s13, 2
      %s26 = sadd.s32 1, %s21
      %p27 = scmp.ge.s32.totalorder %s26, 3
      %s28 = scalar_select %p27, 0, %s26
      %s29 = sadd.s32 1, %s20
      %s30 = scalar_select %p27, %s29, %s20
      %p31 = scmp.ge.s32.totalorder %s30, 2
      %s32 = scalar_select %p31, 0, %s30
      %s33 = ssub.s32 %s20, %s32
      %s34 = ssub.s32 %s21, %s28
      %s35 = sor.u32 %s33, %s34
      %p36 = scmp.eq.s32.totalorder %s35, 0
      %s38 = sadd.s32 %s37, 1
      %s39 = scalar_select %p36, %s37, %s38
      %p42 = pneg %p36
      %p43 = scmp.eq.s32.totalorder %s13, 5
      %p44 = por %p42, %p43
      %p45 = scmp.ne.s32.totalorder %s37, %s40
      %p46 = scmp.eq.s32.totalorder %s13, 0
      %p47 = por %p45, %p46
      %p48 = scmp.ne.s32.totalorder %s37, %s40
      %p49 = scmp.eq.s32.totalorder %s18, 5
      %p50 = por %p48, %p49
      %p51 = scmp.ne.s32.totalorder %s40, %s41
      %p52 = scmp.eq.s32.totalorder %s18, 0
      %p53 = por %p51, %p52
      %p54 = scmp.ne.s32.totalorder %s40, %s41
      %p55 = scmp.eq.s32.totalorder %s19, 5
      %p56 = por %p54, %p55
      %p58 = scmp.ne.s32.totalorder %s41, %s57
      %p59 = scmp.eq.s32.totalorder %s19, 0
      %p60 = por %p58, %p59
      %s62 = sadd.s32 %s61, 1
      %p65 = scmp.eq.s32.totalorder %s13, 5
      %p66 = scmp.ne.s32.totalorder %s61, %s63
      %p67 = scmp.eq.s32.totalorder %s13, 0
      %p68 = por %p66, %p67
      %p69 = scmp.ne.s32.totalorder %s61, %s63
      %p70 = scmp.eq.s32.totalorder %s18, 5
      %p71 = por %p69, %p70
      %p72 = scmp.ne.s32.totalorder %s63, %s64
      %p73 = scmp.eq.s32.totalorder %s18, 0
      %p74 = por %p72, %p73
      %p75 = scmp.ne.s32.totalorder %s63, %s64
      %p76 = scmp.eq.s32.totalorder %s19, 5
      %p77 = por %p75, %p76
      %p79 = scmp.ne.s32.totalorder %s64, %s78
      %p80 = scmp.eq.s32.totalorder %s19, 0
      %p81 = por %p79, %p80
      %s83 = sadd.s32 %s82, 1
      %p86 = scmp.eq.s32.totalorder %s13, 5
      %p87 = scmp.ne.s32.totalorder %s82, %s84
      %p88 = scmp.eq.s32.totalorder %s13, 0
      %p89 = por %p87, %p88
      %p90 = scmp.ne.s32.totalorder %s82, %s84
      %p91 = scmp.eq.s32.totalorder %s18, 5
      %p92 = por %p90, %p91
      %p93 = scmp.ne.s32.totalorder %s84, %s85
      %p94 = scmp.eq.s32.totalorder %s18, 0
      %p95 = por %p93, %p94
      %p96 = scmp.ne.s32.totalorder %s84, %s85
      %p97 = scmp.eq.s32.totalorder %s19, 5
      %p98 = por %p96, %p97
      %p100 = scmp.ne.s32.totalorder %s85, %s99
      %p101 = scmp.eq.s32.totalorder %s19, 0
      %p102 = por %p100, %p101
      %s104 = sadd.s32 %s103, 1
      %p107 = scmp.eq.s32.totalorder %s13, 5
      %p108 = scmp.ne.s32.totalorder %s103, %s105
      %p109 = scmp.eq.s32.totalorder %s13, 0
      %p110 = por %p108, %p109
      %p111 = scmp.ne.s32.totalorder %s103, %s105
      %p112 = scmp.eq.s32.totalorder %s18, 5
      %p113 = por %p111, %p112
      %p114 = scmp.ne.s32.totalorder %s105, %s106
      %p115 = scmp.eq.s32.totalorder %s18, 0
      %p116 = por %p114, %p115
      %p117 = scmp.ne.s32.totalorder %s105, %s106
      %p118 = scmp.eq.s32.totalorder %s19, 5
      %p119 = por %p117, %p118
      %p121 = scmp.ne.s32.totalorder %s106, %s120
      %p122 = scmp.eq.s32.totalorder %s19, 0
      %p123 = por %p121, %p122
      %s124 = ssub.s32 %s20, %s32
      %p125 = scmp.eq.s32.totalorder %s124, 0
      %s127 = sadd.s32 %s126, 1
      %s128 = scalar_select %p125, %s126, %s127
      %p131 = pneg %p125
      %p132 = scmp.eq.s32.totalorder %s13, 5
      %p133 = por %p131, %p132
      %p134 = scmp.ne.s32.totalorder %s126, %s129
      %p135 = scmp.eq.s32.totalorder %s13, 0
      %p136 = por %p134, %p135
      %p137 = scmp.ne.s32.totalorder %s126, %s129
      %p138 = scmp.eq.s32.totalorder %s18, 5
      %p139 = por %p137, %p138
      %p140 = scmp.ne.s32.totalorder %s129, %s130
      %p141 = scmp.eq.s32.totalorder %s18, 0
      %p142 = por %p140, %p141
      %p143 = scmp.ne.s32.totalorder %s129, %s130
      %p144 = scmp.eq.s32.totalorder %s19, 5
      %p145 = por %p143, %p144
      %p147 = scmp.ne.s32.totalorder %s130, %s146
      %p148 = scmp.eq.s32.totalorder %s19, 0
      %p149 = por %p147, %p148
      %p150 = scmp.le.s32.totalorder 1, %s13
      %p151 = scmp.lt.s32.totalorder %s13, 7
      %p152 = pnand %p150, %p151
      %p153 = pneg %p152
      // Predicated region
      $region9: #{tpu_custom_call.1} parent=5 // pred_check
        _
      $region10: #{tpu_custom_call.1} parent=5 // pred_check_branch
        %155 = sbr.rel (%p152) target = $region12
      $region11: #{tpu_custom_call.1} parent=5 // pred_region
        %s156 = ssub.s32 %s13, 1
        // Predicated region
        $region13: #{tpu_custom_call.1} parent=11 // pred_check
          %p157 = pneg %p74
        $region14: #{tpu_custom_call.1} parent=11 // pred_check_branch
          %159 = sbr.rel (%p157) target = $region16
        $region15: #{tpu_custom_call.1} parent=11 // pred_region
          _
        $region16: #{tpu_custom_call.1} parent=11 // pred_fallthru
          _
        // Predicated region
        $region17: #{tpu_custom_call.1} parent=11 // pred_check
          %p160 = pneg %p95
        $region18: #{tpu_custom_call.1} parent=11 // pred_check_branch
          %162 = sbr.rel (%p160) target = $region20
        $region19: #{tpu_custom_call.1} parent=11 // pred_region
          _
        $region20: #{tpu_custom_call.1} parent=11 // pred_fallthru
          _
        // Predicated region
        $region21: #{tpu_custom_call.1} parent=11 // pred_check
          %p163 = pneg %p116
        $region22: #{tpu_custom_call.1} parent=11 // pred_check_branch
          %165 = sbr.rel (%p163) target = $region24
        $region23: #{tpu_custom_call.1} parent=11 // pred_region
          _
        $region24: #{tpu_custom_call.1} parent=11 // pred_fallthru
          _
      $region12: #{tpu_custom_call.1} parent=5 // pred_fallthru
        _
      %p166 = scmp.lt.s32.totalorder %s13, 6
      // Predicated region
      $region25: #{tpu_custom_call.1} parent=5 // pred_check
        %p167 = pneg %p166
      $region26: #{tpu_custom_call.1} parent=5 // pred_check_branch
        %169 = sbr.rel (%p167) target = $region28
      $region27: #{tpu_custom_call.1} parent=5 // pred_region
        // Predicated region
        $region29: #{tpu_custom_call.1} parent=27 // pred_check
          %p170 = pneg %p47
        $region30: #{tpu_custom_call.1} parent=27 // pred_check_branch
          %172 = sbr.rel (%p170) target = $region32
        $region31: #{tpu_custom_call.1} parent=27 // pred_region
          %s173 = smul.u32 2, %s21
          %p174 = scmp.lt.s32.totalorder %s20, 1
          %s175 = scalar_select %p174, %s20, 1
          %p176 = scmp.lt.s32.totalorder %s173, 5
          %s177 = scalar_select %p176, %s173, 5
          %s178 = smul.addr %s175, 6
          %s179 = sadd.s32 %s177, %s178
          %s180 = smul.addr %s179, 8
          %s181 = scalar_lea.vmem %s0, %s180
          %s182 = smul.u32 2, %s21
        $region32: #{tpu_custom_call.1} parent=27 // pred_fallthru
          _
      $region28: #{tpu_custom_call.1} parent=5 // pred_fallthru
        _
      %p183 = scmp.le.s32.totalorder 1, %s13
      %p184 = scmp.lt.s32.totalorder %s13, 7
      %p185 = pnand %p183, %p184
      %p186 = pneg %p185
      // Predicated region
      $region33: #{tpu_custom_call.1} parent=5 // pred_check
        _
      $region34: #{tpu_custom_call.1} parent=5 // pred_check_branch
        %188 = sbr.rel (%p185) target = $region36
      $region35: #{tpu_custom_call.1} parent=5 // pred_region
        %s189 = ssub.s32 %s13, 1
        %s190 = smul.u32 2, %s23
        %p191 = scmp.lt.s32.totalorder %s22, 1
        %s192 = scalar_select %p191, %s22, 1
        %p193 = scmp.lt.s32.totalorder %s190, 5
        %s194 = scalar_select %p193, %s190, 5
        %s195 = smul.addr %s192, 6
        %s196 = sadd.s32 %s194, %s195
        %s197 = smul.addr %s196, 8
        %s198 = scalar_lea.vmem %s0, %s197
        %p199 = pneg %p53
        %p200 = pneg %p50
        %p201 = pneg %p74
        %p202 = pneg %p71
        %p203 = pneg %p95
        %p204 = pneg %p92
        %p205 = pneg %p116
        %p206 = pneg %p113
        %p207 = pneg %p142
        %p208 = pneg %p139
        %s209 = sand.u32 %s129, 1
        %s210 = scalar_lea.sflag [#allocation7], %s209
        %s211 = sand.u32 %s129, 1
        %s212 = smul.addr %s211, 2
        %s213 = scalar_lea.vmem [#allocation6], %s212
        %s214 = smul.u32 2, %s23
        %p215 = scmp.lt.s32.totalorder %s22, 1
        %s216 = scalar_select %p215, %s22, 1
        %p217 = scmp.lt.s32.totalorder %s214, 5
        %s218 = scalar_select %p217, %s214, 5
        %s219 = smul.addr %s216, 6
        %s220 = sadd.s32 %s218, %s219
        %s221 = smul.addr %s220, 8
        %s222 = scalar_lea.vmem %s0, %s221
        %s223 = smul.u32 2, %s23
        %p224 = scmp.eq.s32.totalorder %s23, 0
        // Predicated region
        $region37: #{tpu_custom_call.1} parent=35 // pred_check
          %p225 = pneg %p224
        $region38: #{tpu_custom_call.1} parent=35 // pred_check_branch
          %227 = sbr.rel (%p225) target = $region40
        $region39: #{tpu_custom_call.1} parent=35 // pred_region
          %vm228 = vcmask 0
          %229 = vst.msk [vmem:[#allocation2] sm:$0x1] %vm228, -inf
          %230 = vst.msk [vmem:[#allocation3] sm:$0x1] %vm228, 0.0
          %vm231 = vcmask 122880
          %232 = vst.msk [vmem:[#allocation4] sm:$0x1] %vm231, 0.0
          %233 = vst.msk [vmem:[#allocation5] sm:$0x1] %vm231, 0.0
        $region40: #{tpu_custom_call.1} parent=35 // pred_fallthru
          _
        %v234 = vld [vmem:[%s222] sm:$0xff]
        %v235 = vld [vmem:[%s222 + $0x8] sm:$0xff]
        %v236 = vld [vmem:[%s1] sm:$0xff]
        %v237 = vld [vmem:[%s1 + $0x8] sm:$0xff]
        %v238 = vld [vmem:[%s2] sm:$0x1]
        %v239 = vld [vmem:[%s3] sm:$0x1]
        %v241 = vlaneseq
        %v242 = vshrl.u32 %v241, 7
        %v243 = vsub.s32 0, %v242
        %v244 = vrot.slane %v238, %v243
        %vm246 = vcmask 130048
        %v248 = vsel %vm246, %v234, 0
        %v251 = vsel %vm246, %v235, 0
        %253 = vmatprep.subr.mxu0 0.0
        %254 = vmatpush1.msra.mxu0 %v236
        %255 = vmatprep.subr.mxu0 0.0
        %256 = vmatpush1.msra.mxu0 %v237
        %257 = vmatprep.subr.mxu0 0.0
        %258 = vmatpush1.msra.mxu0 0.0
        %259 = vmatprep.subr.mxu0 0.0
        %260 = vmatpush1.msra.mxu0 0.0
        %261 = vmatprep.subr.mxu0 0.0
        %262 = vmatpush1.msra.mxu0 0.0
        %263 = vmatprep.subr.mxu0 0.0
        %264 = vmatpush1.msra.mxu0 0.0
        %265 = vmatprep.subr.mxu0 0.0
        %266 = vmatpush1.msra.mxu0 0.0
        %267 = vmatprep.subr.mxu0 0.0
        %268 = vmatpush1.msra.mxu0 0.0
        %269 = vmatprep.subr.mxu0 0.0
        %270 = vmatpush1.msra.mxu0 0.0
        %271 = vmatprep.subr.mxu0 0.0
        %272 = vmatpush1.msra.mxu0 0.0
        %273 = vmatprep.subr.mxu0 0.0
        %274 = vmatpush1.msra.mxu0 0.0
        %275 = vmatprep.subr.mxu0 0.0
        %276 = vmatpush1.msra.mxu0 0.0
        %277 = vmatprep.subr.mxu0 0.0
        %278 = vmatpush1.msra.mxu0 0.0
        %279 = vmatprep.subr.mxu0 0.0
        %280 = vmatpush1.msra.mxu0 0.0
        %281 = vmatprep.subr.mxu0 0.0
        %282 = vmatpush1.msra.mxu0 0.0
        %283 = vmatprep.subr.mxu0 0.0
        %284 = vmatpush1.msra.mxu0 0.0
        %285 = vmatprep.subr.mxu0 0.0
        %286 = vmatpush1.msra.mxu0 0.0
        %287 = vmatprep.subr.mxu0 0.0
        %288 = vmatpush1.msra.mxu0 0.0
        %289 = vmatprep.subr.mxu0 0.0
        %290 = vmatpush1.msra.mxu0 0.0
        %291 = vmatprep.subr.mxu0 0.0
        %292 = vmatpush1.msra.mxu0 0.0
        %293 = vmatprep.subr.mxu0 0.0
        %294 = vmatpush1.msra.mxu0 0.0
        %295 = vmatprep.subr.mxu0 0.0
        %296 = vmatpush1.msra.mxu0 0.0
        %297 = vmatprep.subr.mxu0 0.0
        %298 = vmatpush1.msra.mxu0 0.0
        %299 = vmatprep.subr.mxu0 0.0
        %300 = vmatpush1.msra.mxu0 0.0
        %301 = vmatprep.subr.mxu0 0.0
        %302 = vmatpush1.msra.mxu0 0.0
        %303 = vmatprep.subr.mxu0 0.0
        %304 = vmatpush1.msra.mxu0 0.0
        %305 = vmatprep.subr.mxu0 0.0
        %306 = vmatpush1.msra.mxu0 0.0
        %307 = vmatprep.subr.mxu0 0.0
        %308 = vmatpush1.msra.mxu0 0.0
        %309 = vmatprep.subr.mxu0 0.0
        %310 = vmatpush1.msra.mxu0 0.0
        %311 = vmatprep.subr.mxu0 0.0
        %312 = vmatpush1.msra.mxu0 0.0
        %313 = vmatprep.subr.mxu0 0.0
        %314 = vmatpush1.msra.mxu0 0.0
        %315 = vmatprep.subr.mxu0 0.0
        %316 = vmatpush1.msra.mxu0 0.0
        %317 = vmatprep.mubr.f32.mxu0 0.0
        %318 = vmatmul.mubr.f32.gmra.mrb[0].mxu0 %v248
        %v319 = vpop.f32.mrb[0].mxu0
        %v320 = vadd.f32 %v244, %v319
        %v321 = vpop.f32.mrb[0].mxu0
        %322 = vmatprep.mubr.f32.mxu0 0.0
        %323 = vmatmul.mubr.f32.gmra.mrb[0].mxu0 %v251
        %v324 = vpop.f32.mrb[0].mxu0
        %v325 = vadd.f32 %v244, %v324
        %v326 = vpop.f32.mrb[0].mxu0
        %327 = vdwg.mxu0
        %v328 = vtanh.pop %v320
        %v329 = vtanh.pop %v325
        %v331 = vlaneseq
        %v332 = vshrl.u32 %v331, 7
        %v333 = vsub.s32 0, %v332
        %v334 = vrot.slane %v239, %v333
        %v336 = vmul.f32 %v328, %v334
        %v337 = vmul.f32 %v329, %v334
        %v338 = vsel %vm246, %v336, 0.0
        %339 = vadd.xlane.f32.xlu0 %v338
        %v340 = vpop.xlane.xlu0 %339
        %v341 = vsel %vm246, %v337, 0.0
        %342 = vadd.xlane.f32.xlu0 %v341
        %v343 = vpop.xlane.xlu0 %342
        %s344 = smul.u32 %s23, 16
        %v345 = vlaneseq
        %v346 = vshrl.u32 %v345, 7
        %v347 = vadd.s32 %v346, 8
        %v348 = vstv %s344
        %v349 = vadd.s32 %v348, %v346
        %v350 = vadd.s32 %v348, %v347
        %vm351 = vcmp.lt.s32.totalorder %v349, 40
        %vm352 = vcmp.lt.s32.totalorder %v350, 40
        %v353 = vsel %vm351, %v340, -inf
        %v354 = vsel %vm352, %v343, -inf
        %v355 = vld [vmem:[#allocation2] sm:$0x1]
        %v356 = vmax.f32 %v353, %v354
        %v357 = vrot.slane %v356, 4
        %v358 = vmax.f32 %v356, %v357
        %v359 = vrot.slane %v358, 2
        %v360 = vmax.f32 %v358, %v359
        %v361 = vrot.slane %v360, 1
        %v362 = vmax.f32 %v360, %v361
        %v363 = vmax.f32 %v355, %v362
        %v364 = vsub.f32 %v355, %v363
        %v365 = vmul.f32 %v364, 1.442695
        %v366 = vpow.pop %v365
        %v368 = vlaneseq
        %v369 = vshrl.u32 %v368, 7
        %v370 = vsub.s32 0, %v369
        %v371 = vrot.slane %v363, %v370
        %v373 = vsub.f32 %v353, %v371
        %v374 = vsub.f32 %v354, %v371
        %v375 = vmul.f32 %v373, 1.442695
        %v376 = vpow.pop %v375
        %v377 = vmul.f32 %v374, 1.442695
        %v378 = vpow.pop %v377
        %380 = vset.pattern.permute.xlu0 0
        %381 = vperm.xlu0 %380, %v376
        %v382 = vpop.permute.xlu0 %381
        %385 = vset.pattern.permute.xlu0 0
        %386 = vperm.xlu0 %385, %v378
        %v387 = vpop.permute.xlu0 %386
        %v389 = vmul.f32 %v382, %v234
        %v390 = vmul.f32 %v387, %v235
        %v391 = vld [vmem:[#allocation3] sm:$0x1]
        %v392 = vmul.f32 %v366, %v391
        %vm393 = vcmask 7168
        %v394 = vsel %vm393, %v376, 0.0
        %v395 = vsel %vm393, %v378, 0.0
        %v396 = vadd.f32 %v394, %v395
        %v397 = vrot.slane %v396, 4
        %v398 = vadd.f32 %v396, %v397
        %v399 = vrot.slane %v398, 2
        %v400 = vadd.f32 %v398, %v399
        %v401 = vrot.slane %v400, 1
        %v402 = vadd.f32 %v400, %v401
        %v403 = vadd.f32 %v392, %v402
        %vm404 = vcmask 0
        %405 = vst.msk [vmem:[#allocation3] sm:$0x1] %vm404, %v403
        %v406 = vld [vmem:[#allocation4] sm:$0x1]
        %408 = vset.pattern.permute.xlu0 0
        %409 = vperm.xlu0 %408, %v366
        %v410 = vpop.permute.xlu0 %409
        %v412 = vlaneseq
        %v413 = vshrl.u32 %v412, 7
        %v414 = vsub.s32 0, %v413
        %v415 = vrot.slane %v410, %v414
        %v416 = vmul.f32 %v415, %v406
        %v417 = vsel %vm246, %v389, 0.0
        %v418 = vsel %vm246, %v390, 0.0
        %v419 = vadd.f32 %v417, %v418
        %v420 = vrot.slane %v419, 4
        %v421 = vadd.f32 %v419, %v420
        %v422 = vrot.slane %v421, 2
        %v423 = vadd.f32 %v421, %v422
        %v424 = vrot.slane %v423, 1
        %v425 = vadd.f32 %v423, %v424
        %v426 = vadd.f32 %v416, %v425
        %vm427 = vcmask 122880
        %428 = vst.msk [vmem:[#allocation4] sm:$0x1] %vm427, %v426
        %v429 = vld [vmem:[#allocation5] sm:$0x1]
        %v430 = vmul.f32 %v415, %v429
        %v431 = vmul.f32 %v389, %v234
        %v432 = vmul.f32 %v390, %v235
        %v433 = vsel %vm246, %v431, 0.0
        %v434 = vsel %vm246, %v432, 0.0
        %v435 = vadd.f32 %v433, %v434
        %v436 = vrot.slane %v435, 4
        %v437 = vadd.f32 %v435, %v436
        %v438 = vrot.slane %v437, 2
        %v439 = vadd.f32 %v437, %v438
        %v440 = vrot.slane %v439, 1
        %v441 = vadd.f32 %v439, %v440
        %v442 = vadd.f32 %v430, %v441
        %443 = vst.msk [vmem:[#allocation5] sm:$0x1] %vm427, %v442
        %444 = vst.msk [vmem:[#allocation2] sm:$0x1] %vm404, %v363
        %p445 = scmp.eq.s32.totalorder %s23, 2
        // Predicated region
        $region41: #{tpu_custom_call.1} parent=35 // pred_check
          %p446 = pneg %p445
        $region42: #{tpu_custom_call.1} parent=35 // pred_check_branch
          %448 = sbr.rel (%p446) target = $region44
        $region43: #{tpu_custom_call.1} parent=35 // pred_region
          %v449 = vld [vmem:[#allocation3] sm:$0x1]
          %v450 = vrcp.pop %v449
          %v451 = vmul.f32 1.0, %v450
          %v452 = vld [vmem:[#allocation4] sm:$0x1]
          %454 = vset.pattern.permute.xlu0 0
          %455 = vperm.xlu0 %454, %v451
          %v456 = vpop.permute.xlu0 %455
          %v458 = vlaneseq
          %v459 = vshrl.u32 %v458, 7
          %v460 = vsub.s32 0, %v459
          %v461 = vrot.slane %v456, %v460
          %v462 = vmul.f32 %v452, %v461
          %v463 = vld [vmem:[#allocation5] sm:$0x1]
          %v464 = vmul.f32 %v463, %v461
          %v465 = vmul.f32 %v462, %v462
          %v466 = vsub.f32 %v464, %v465
          %v467 = vmax.f32 %v466, 1e-05
          %v468 = vrsqrt.pop %v467
          %v469 = vmul.f32 %v467, %v468
          %vm470 = vcmp.eq.f32.partialorder %v467, inf
          %v471 = vsel %vm470, %v467, %v469
          %vm472 = vcmp.eq.f32.partialorder %v467, 0.0
          %v473 = vand.u32 %v467, 2147483648
          %v474 = vsel %vm472, %v473, %v471
          %v476 = vlaneseq
          %v477 = vshrl.u32 %v476, 7
          %v478 = vsub.s32 0, %v477
          %v479 = vrot.slane %v474, %v478
          %vm481 = vcmask 1040384
          %v482 = vsel %vm481, %v462, %v479
          %vm483 = vcmask 123904
          %484 = vst.msk [vmem:[%s213] sm:$0x3] %vm483, %v482
        $region44: #{tpu_custom_call.1} parent=35 // pred_fallthru
          _
        %s485 = sand.u32 %s129, 1
        %s486 = scalar_lea.sflag [#allocation7], %s485
        %s487 = sand.u32 %s129, 1
        %s488 = smul.addr %s487, 2
        %s489 = scalar_lea.vmem [#allocation6], %s488
        // Predicated region
        $region45: #{tpu_custom_call.1} parent=35 // pred_check
          %p490 = pneg %p139
        $region46: #{tpu_custom_call.1} parent=35 // pred_check_branch
          %492 = sbr.rel (%p490) target = $region48
        $region47: #{tpu_custom_call.1} parent=35 // pred_region
          %s494 = ssub.s32 32, 32
          %495 = vsyncadd %s486, %s494
          %s496 = smul.addr %s22, 32
          %s497 = scalar_lea.hbm %s4, %s496
          %s499 = sshll.u32 %s489, 4
          %s500 = int_to_ptr.vmem [resolvable:$true] %s499
          %502 = dma.vmem_to_hbm [thread:$0]  %s500, 32, %s497, %s486
        $region48: #{tpu_custom_call.1} parent=35 // pred_fallthru
          _
      $region36: #{tpu_custom_call.1} parent=5 // pred_fallthru
        _
      %p503 = scmp.le.s32.totalorder 2, %s13
      // Predicated region
      $region49: #{tpu_custom_call.1} parent=5 // pred_check
        %p504 = pneg %p503
      $region50: #{tpu_custom_call.1} parent=5 // pred_check_branch
        %506 = sbr.rel (%p504) target = $region52
      $region51: #{tpu_custom_call.1} parent=5 // pred_region
        %s507 = ssub.s32 %s13, 2
        // Predicated region
        $region53: #{tpu_custom_call.1} parent=51 // pred_check
          %p508 = pneg %p145
        $region54: #{tpu_custom_call.1} parent=51 // pred_check_branch
          %510 = sbr.rel (%p508) target = $region56
        $region55: #{tpu_custom_call.1} parent=51 // pred_region
          %s511 = sand.u32 %s130, 1
          %s512 = scalar_lea.sflag [#allocation7], %s511
          %s513 = sand.u32 %s130, 1
          %s514 = smul.addr %s513, 2
          %s515 = scalar_lea.vmem [#allocation6], %s514
          %516 = dma.done %s512, 32
        $region56: #{tpu_custom_call.1} parent=51 // pred_fallthru
          _
      $region52: #{tpu_custom_call.1} parent=5 // pred_fallthru
        _
    $region6: #{tpu_custom_call.1} parent=1 // loop_footer
      %s17 = sadd.s32 1, %s13
    $region7: #{tpu_custom_call.1} parent=1 // loop_footer_branch
      %12 = sbr.rel target = $region3
    $region8: #{tpu_custom_call.1} parent=1 // loop_exit
      _
    %517 = vsyncpa [#allocation7], 1
    %s518 = scalar_lea.sflag [#allocation7], 1
    %519 = vsyncpa %s518, 1

</llo_original>
